<compile_context>
chip_gen: v5e
topology: v5e:2x2
jax: 0.10.0
libtpu: 0.0.40
codegen_flags: <defaults>
</compile_context>

<pallas_src>
import math
import jax
import jax.numpy as jnp
from jax import lax
from jax.experimental import pallas as pl
from jax.experimental.pallas import tpu as pltpu

# --- model hyper-parameters (mirrors TransformerConfig in modele.py) ---
VOCAB = 64
D_MODEL = 32
N_HEADS = 4
D_HEAD = D_MODEL // N_HEADS
N_LAYERS = 1
MAX_LEN = 8
EPS = 1e-5
V_PAD = 128            # vocab padded to a full lane register for dense stores


def _rmsnorm(x, w, eps=EPS):
    ms = jnp.mean(x * x, axis=-1, keepdims=True)
    return x * lax.rsqrt(ms + eps) * w


def lm_kernel(x_ref, attn_nw_ref, wqkv_ref, wc_ref, mlp_nw_ref, w13_ref,
              w2_ref, out_nw_ref, wlm_ref, o_ref):
    """One grid step = one batch element: decoder layer + out_norm + LM head."""
    h = x_ref[...]                                        # (S, D) f32
    S = h.shape[0]

    # Causal mask built in-kernel from iota -- no (HN,HN) bias DMA'd from HBM.
    rows = lax.broadcasted_iota(jnp.int32, (S, S), 0)
    cols = lax.broadcasted_iota(jnp.int32, (S, S), 1)
    causal = rows >= cols

    # ---- self-attention block (pre-norm, residual) ----
    hn = _rmsnorm(h, attn_nw_ref[...])
    # fused QKV projection (bf16 operands, f32 accumulate); 1/sqrt(d_head) is
    # folded into the Q columns in prepare_params.
    qkv = jnp.dot(hn.astype(jnp.bfloat16), wqkv_ref[...],
                  preferred_element_type=jnp.float32)     # (S, 3D) f32
    attn_out = jnp.zeros((S, D_MODEL), jnp.float32)
    for hd in range(N_HEADS):                             # unrolled, H = 4
        qh = qkv[:, hd * D_HEAD:(hd + 1) * D_HEAD]
        kh = qkv[:, D_MODEL + hd * D_HEAD:D_MODEL + (hd + 1) * D_HEAD]
        vh = qkv[:, 2 * D_MODEL + hd * D_HEAD:2 * D_MODEL + (hd + 1) * D_HEAD]
        s = lax.dot_general(qh.astype(jnp.bfloat16), kh.astype(jnp.bfloat16),
                            (((1,), (1,)), ((), ())),
                            preferred_element_type=jnp.float32)       # (S, S)
        # large-finite (not -inf): the diagonal is always allowed, so every row
        # keeps a finite max and exp never sees NaN.
        s = jnp.where(causal, s, -1e30)
        s = s - jnp.max(s, axis=-1, keepdims=True)
        e = jnp.exp(s)                                                 # f32 EUP
        p = e * pl.reciprocal(jnp.sum(e, axis=-1, keepdims=True), approx=True)
        ctx = jnp.dot(p.astype(jnp.bfloat16), vh.astype(jnp.bfloat16),
                      preferred_element_type=jnp.float32)              # (S, Dh)
        # fold this head's context straight into its rows of c_proj: the
        # per-head contributions just sum, so no head concat / lane relayout.
        attn_out = attn_out + jnp.dot(ctx.astype(jnp.bfloat16), wc_ref[hd],
                                      preferred_element_type=jnp.float32)
    x1 = h + attn_out

    # ---- MLP block: fc_2(silu(fc_1(x)) * fc_3(x)); fc_1 | fc_3 fused ----
    x1n = _rmsnorm(x1, mlp_nw_ref[...])
    g = jnp.dot(x1n.astype(jnp.bfloat16), w13_ref[...],
                preferred_element_type=jnp.float32)        # (S, 8D) f32
    a = g[:, :4 * D_MODEL]
    b = g[:, 4 * D_MODEL:]
    mlp = jnp.dot((jax.nn.silu(a) * b).astype(jnp.bfloat16), w2_ref[...],
                  preferred_element_type=jnp.float32)
    x2 = x1 + mlp

    # ---- output norm + tied LM head (vocab zero-padded -> lane-dense store) ----
    xo = _rmsnorm(x2, out_nw_ref[...])
    o_ref[...] = jnp.dot(xo.astype(jnp.bfloat16), wlm_ref[...],
                         preferred_element_type=jnp.float32)


def prepare_params(p):
    """One-time weight fusion / layout prep -- NOT in the per-call path."""
    scale = 1.0 / math.sqrt(D_HEAD)
    f32 = jnp.float32
    wqkv = jnp.concatenate([p["wq"].T * scale, p["wk"].T, p["wv"].T], axis=1)
    wc_heads = p["wc"].T.reshape(N_HEADS, D_HEAD, D_MODEL)      # per-head rows
    w13 = jnp.concatenate([p["w1"].T, p["w3"].T], axis=1)
    wlm = jnp.zeros((D_MODEL, V_PAD), f32).at[:, :VOCAB].set(p["embedding"].T)
    return dict(
        embedding=p["embedding"].astype(f32),
        pos_emb=p["pos_emb"].astype(f32),
        attn_norm_w=p["attn_norm_w"].astype(f32),
        mlp_norm_w=p["mlp_norm_w"].astype(f32),
        out_norm_w=p["out_norm_w"].astype(f32),
        wqkv=wqkv.astype(jnp.bfloat16),        # (D, 3D)  scaled Q | K | V
        wc_heads=wc_heads.astype(jnp.bfloat16),  # (H, Dh, D)
        w13=w13.astype(jnp.bfloat16),          # (D, 8D)  fc_1 | fc_3
        w2=p["w2"].T.astype(jnp.bfloat16),     # (4D, D)
        wlm=wlm.astype(jnp.bfloat16),          # (D, 128) tied head, padded
    )


@jax.jit
def language_model_forward(tokens, fp):
    B, S = tokens.shape
    D = D_MODEL
    # Glue (plain JAX, fused into the same jit): embedding gather + positions.
    x = (fp["embedding"][tokens] + fp["pos_emb"][:S]).astype(jnp.float32)

    def bcast(shape):
        return pl.BlockSpec(shape, lambda b: (0,) * len(shape))

    # NOTE: for real workloads feed >=256 tokens per grid step so the MXU
    # rows/lanes fill up; this small shape is launch-overhead-bound by design.
    logits_pad = pl.pallas_call(
        lm_kernel,
        out_shape=jax.ShapeDtypeStruct((B, S, V_PAD), jnp.float32),
        grid=(B,),                          # batch on grid -> both TCs on v7x
        in_specs=[
            pl.BlockSpec((None, S, D), lambda b: (b, 0, 0)),   # x (per batch)
            bcast((1, D)),                                     # attention_norm
            bcast((D, 3 * D)),                                 # fused Wqkv
            bcast((N_HEADS, D_HEAD, D)),                       # c_proj per head
            bcast((1, D)),                                     # mlp_norm
            bcast((D, 8 * D)),                                 # fc_1 | fc_3
            bcast((4 * D, D)),                                 # fc_2
            bcast((1, D)),                                     # out_norm
            bcast((D, V_PAD)),                                 # tied lm_head
        ],
        out_specs=pl.BlockSpec((None, S, V_PAD), lambda b: (b, 0, 0)),
        compiler_params=pltpu.CompilerParams(
            dimension_semantics=("parallel",)),
    )(x, fp["attn_norm_w"], fp["wqkv"], fp["wc_heads"], fp["mlp_norm_w"],
      fp["w13"], fp["w2"], fp["out_norm_w"], fp["wlm"])

    return logits_pad[..., :VOCAB]


def init_params(key):
    ks = jax.random.split(key, 10)
    std = 0.02
    std_proj = 0.02 / math.sqrt(2 * N_LAYERS)   # fc_3.weight / c_proj.weight
    n = lambda k, shape, s: (s * jax.random.normal(k, shape)).astype(jnp.float32)
    return dict(
        embedding=n(ks[0], (VOCAB, D_MODEL), std),      # also lm_head (tied)
        pos_emb=n(ks[1], (MAX_LEN, D_MODEL), std),
        attn_norm_w=jnp.ones((1, D_MODEL), jnp.float32),
        wq=n(ks[2], (D_MODEL, D_MODEL), std),
        wk=n(ks[3], (D_MODEL, D_MODEL), std),
        wv=n(ks[4], (D_MODEL, D_MODEL), std),
        wc=n(ks[5], (D_MODEL, D_MODEL), std_proj),
        mlp_norm_w=jnp.ones((1, D_MODEL), jnp.float32),
        w1=n(ks[6], (4 * D_MODEL, D_MODEL), std),
        w3=n(ks[7], (4 * D_MODEL, D_MODEL), std_proj),
        w2=n(ks[8], (D_MODEL, 4 * D_MODEL), std),
        out_norm_w=jnp.ones((1, D_MODEL), jnp.float32),
    )


def reference_forward(tokens, p):
    """Pure-JAX f32 reference mirroring the PyTorch forward (dropout=0)."""
    x = p["embedding"][tokens] + p["pos_emb"][:tokens.shape[1]]

    def rms(v, w):
        return v * lax.rsqrt(jnp.mean(v * v, -1, keepdims=True) + EPS) * w

    B, S, D = x.shape
    hn = rms(x, p["attn_norm_w"][0])
    q = (hn @ p["wq"].T).reshape(B, S, N_HEADS, D_HEAD).transpose(0, 2, 1, 3)
    k = (hn @ p["wk"].T).reshape(B, S, N_HEADS, D_HEAD).transpose(0, 2, 1, 3)
    v = (hn @ p["wv"].T).reshape(B, S, N_HEADS, D_HEAD).transpose(0, 2, 1, 3)
    sc = jnp.einsum('bhqd,bhkd->bhqk', q, k) / math.sqrt(D_HEAD)
    sc = jnp.where(jnp.tril(jnp.ones((S, S), bool)), sc, -jnp.inf)
    pr = jax.nn.softmax(sc, -1)
    at = jnp.einsum('bhqk,bhkd->bhqd', pr, v).transpose(0, 2, 1, 3).reshape(B, S, D)
    x1 = x + at @ p["wc"].T
    x1n = rms(x1, p["mlp_norm_w"][0])
    x2 = x1 + (jax.nn.silu(x1n @ p["w1"].T) * (x1n @ p["w3"].T)) @ p["w2"].T
    return rms(x2, p["out_norm_w"][0]) @ p["embedding"].T


if __name__ == "__main__":
    key = jax.random.PRNGKey(0)
    pkey, tkey = jax.random.split(key)
    params = init_params(pkey)
    fused = jax.block_until_ready(prepare_params(params))   # one-time prep

    B, S = 2, MAX_LEN
    tokens = jax.random.randint(tkey, (B, S), 0, VOCAB, dtype=jnp.int32)

    logits = jax.block_until_ready(language_model_forward(tokens, fused))
    assert logits.shape == (B, S, VOCAB)
    assert bool(jnp.all(jnp.isfinite(logits)))

    ref = reference_forward(tokens, params)
    # bf16 MXU operands + approx softmax reciprocal -> bf16-level tolerance
    # against the f32 reference.
    err = float(jnp.max(jnp.abs(logits - ref)))
    assert bool(jnp.allclose(logits, ref, atol=2e-2, rtol=2e-2)), err

    print("KERNEL_OK")
</pallas_src>

<mosaic_0001>
module attributes {stable_mosaic.version = 11 : i64} {
  func.func @lm_kernel(%arg0: i32, %arg1: memref<1x8x32xf32, #tpu.memory_space<vmem>>, %arg2: memref<1x32xf32, #tpu.memory_space<vmem>>, %arg3: memref<32x96xbf16, #tpu.memory_space<vmem>>, %arg4: memref<4x8x32xbf16, #tpu.memory_space<vmem>>, %arg5: memref<1x32xf32, #tpu.memory_space<vmem>>, %arg6: memref<32x256xbf16, #tpu.memory_space<vmem>>, %arg7: memref<128x32xbf16, #tpu.memory_space<vmem>>, %arg8: memref<1x32xf32, #tpu.memory_space<vmem>>, %arg9: memref<32x128xbf16, #tpu.memory_space<vmem>>, %arg10: memref<1x8x128xf32, #tpu.memory_space<vmem>>) attributes {dimension_semantics = [#tpu.dimension_semantics<parallel>], iteration_bounds = array<i64: 2>, scalar_prefetch = 0 : i64, scratch_operands = 0 : i64, tpu.core_type = #tpu.core_type<tc>, window_params = [{transform_indices = @transform_0, window_bounds = array<i64: 1, 8, 32>}, {pipeline_mode = #tpu.pipeline_mode<synchronous>, transform_indices = @transform_1, window_bounds = array<i64: 1, 32>}, {pipeline_mode = #tpu.pipeline_mode<synchronous>, transform_indices = @transform_2, window_bounds = array<i64: 32, 96>}, {pipeline_mode = #tpu.pipeline_mode<synchronous>, transform_indices = @transform_3, window_bounds = array<i64: 4, 8, 32>}, {pipeline_mode = #tpu.pipeline_mode<synchronous>, transform_indices = @transform_4, window_bounds = array<i64: 1, 32>}, {pipeline_mode = #tpu.pipeline_mode<synchronous>, transform_indices = @transform_5, window_bounds = array<i64: 32, 256>}, {pipeline_mode = #tpu.pipeline_mode<synchronous>, transform_indices = @transform_6, window_bounds = array<i64: 128, 32>}, {pipeline_mode = #tpu.pipeline_mode<synchronous>, transform_indices = @transform_7, window_bounds = array<i64: 1, 32>}, {pipeline_mode = #tpu.pipeline_mode<synchronous>, transform_indices = @transform_8, window_bounds = array<i64: 32, 128>}, {transform_indices = @transform_9, window_bounds = array<i64: 1, 8, 128>}]} {
    %c0 = arith.constant 0 : index
    %c0_0 = arith.constant 0 : index
    %c0_1 = arith.constant 0 : index
    %0 = vector.load %arg1[%c0, %c0_0, %c0_1] : memref<1x8x32xf32, #tpu.memory_space<vmem>>, vector<1x8x32xf32>
    %1 = vector.shape_cast %0 : vector<1x8x32xf32> to vector<8x32xf32>
    %2 = tpu.iota {dimensions = array<i32: 0>} : vector<8x8xi32>
    %3 = tpu.iota {dimensions = array<i32: 1>} : vector<8x8xi32>
    %4 = arith.cmpi sge, %2, %3 : vector<8x8xi32>
    %c0_2 = arith.constant 0 : index
    %c0_3 = arith.constant 0 : index
    %5 = vector.load %arg2[%c0_2, %c0_3] : memref<1x32xf32, #tpu.memory_space<vmem>>, vector<1x32xf32>
    %6 = arith.mulf %1, %1 : vector<8x32xf32>
    %cst = arith.constant dense<0.000000e+00> : vector<8xf32>
    %7 = vector.multi_reduction <add>, %6, %cst [1] : vector<8x32xf32> to vector<8xf32>
    %8 = vector.shape_cast %7 : vector<8xf32> to vector<8x1xf32>
    %cst_4 = arith.constant 3.200000e+01 : f32
    %9 = vector.broadcast %cst_4 : f32 to vector<8x1xf32>
    %10 = arith.divf %8, %9 : vector<8x1xf32>
    %cst_5 = arith.constant 9.99999974E-6 : f32
    %11 = vector.broadcast %cst_5 : f32 to vector<8x1xf32>
    %12 = arith.addf %10, %11 : vector<8x1xf32>
    %13 = math.rsqrt %12 : vector<8x1xf32>
    %14 = vector.broadcast %13 : vector<8x1xf32> to vector<8x32xf32>
    %15 = arith.mulf %1, %14 : vector<8x32xf32>
    %16 = vector.broadcast %5 : vector<1x32xf32> to vector<8x32xf32>
    %17 = arith.mulf %15, %16 : vector<8x32xf32>
    %18 = arith.truncf %17 : vector<8x32xf32> to vector<8x32xbf16>
    %c0_6 = arith.constant 0 : index
    %c0_7 = arith.constant 0 : index
    %19 = vector.load %arg3[%c0_6, %c0_7] : memref<32x96xbf16, #tpu.memory_space<vmem>>, vector<32x96xbf16>
    %cst_8 = arith.constant dense<0.000000e+00> : vector<8x96xf32>
    %20 = tpu.matmul %18, %19, %cst_8 {dimension_numbers = #tpu.dot_dimension_numbers<[1], [0], [0], [1], [0, 0, 1, 1], [], []>} : vector<8x32xbf16>, vector<32x96xbf16>, vector<8x96xf32> -> vector<8x96xf32>
    %cst_9 = arith.constant 0.000000e+00 : f32
    %21 = vector.broadcast %cst_9 : f32 to vector<8x32xf32>
    %22 = vector.extract_strided_slice %20 {offsets = [0, 0], sizes = [8, 8], strides = [1, 1]} : vector<8x96xf32> to vector<8x8xf32>
    %23 = vector.extract_strided_slice %20 {offsets = [0, 32], sizes = [8, 8], strides = [1, 1]} : vector<8x96xf32> to vector<8x8xf32>
    %24 = vector.extract_strided_slice %20 {offsets = [0, 64], sizes = [8, 8], strides = [1, 1]} : vector<8x96xf32> to vector<8x8xf32>
    %25 = arith.truncf %22 : vector<8x8xf32> to vector<8x8xbf16>
    %26 = arith.truncf %23 : vector<8x8xf32> to vector<8x8xbf16>
    %cst_10 = arith.constant dense<0.000000e+00> : vector<8x8xf32>
    %27 = tpu.matmul %25, %26, %cst_10 {dimension_numbers = #tpu.dot_dimension_numbers<[1], [1], [0], [0], [0, 0, 1, 0], [], []>} : vector<8x8xbf16>, vector<8x8xbf16>, vector<8x8xf32> -> vector<8x8xf32>
    %cst_11 = arith.constant -1.000000e+30 : f32
    %28 = vector.broadcast %cst_11 : f32 to vector<8x8xf32>
    %29 = arith.select %4, %27, %28 : vector<8x8xi1>, vector<8x8xf32>
    %cst_12 = arith.constant dense<0xFF800000> : vector<8xf32>
    %30 = vector.multi_reduction <maximumf>, %29, %cst_12 [1] : vector<8x8xf32> to vector<8xf32>
    %31 = vector.shape_cast %30 : vector<8xf32> to vector<8x1xf32>
    %32 = vector.broadcast %31 : vector<8x1xf32> to vector<8x8xf32>
    %33 = arith.subf %29, %32 : vector<8x8xf32>
    %34 = math.exp %33 : vector<8x8xf32>
    %cst_13 = arith.constant dense<0.000000e+00> : vector<8xf32>
    %35 = vector.multi_reduction <add>, %34, %cst_13 [1] : vector<8x8xf32> to vector<8xf32>
    %36 = vector.shape_cast %35 : vector<8xf32> to vector<8x1xf32>
    %37 = tpu.reciprocal %36 {approx = true} : vector<8x1xf32> -> vector<8x1xf32>
    %38 = vector.broadcast %37 : vector<8x1xf32> to vector<8x8xf32>
    %39 = arith.mulf %34, %38 : vector<8x8xf32>
    %40 = arith.truncf %39 : vector<8x8xf32> to vector<8x8xbf16>
    %41 = arith.truncf %24 : vector<8x8xf32> to vector<8x8xbf16>
    %cst_14 = arith.constant dense<0.000000e+00> : vector<8x8xf32>
    %42 = tpu.matmul %40, %41, %cst_14 {dimension_numbers = #tpu.dot_dimension_numbers<[1], [0], [0], [1], [0, 0, 1, 1], [], []>} : vector<8x8xbf16>, vector<8x8xbf16>, vector<8x8xf32> -> vector<8x8xf32>
    %43 = arith.truncf %42 : vector<8x8xf32> to vector<8x8xbf16>
    %c0_15 = arith.constant 0 : index
    %c0_16 = arith.constant 0 : index
    %c0_17 = arith.constant 0 : index
    %44 = vector.load %arg4[%c0_15, %c0_16, %c0_17] : memref<4x8x32xbf16, #tpu.memory_space<vmem>>, vector<1x8x32xbf16>
    %45 = vector.shape_cast %44 : vector<1x8x32xbf16> to vector<8x32xbf16>
    %cst_18 = arith.constant dense<0.000000e+00> : vector<8x32xf32>
    %46 = tpu.matmul %43, %45, %cst_18 {dimension_numbers = #tpu.dot_dimension_numbers<[1], [0], [0], [1], [0, 0, 1, 1], [], []>} : vector<8x8xbf16>, vector<8x32xbf16>, vector<8x32xf32> -> vector<8x32xf32>
    %47 = arith.addf %21, %46 : vector<8x32xf32>
    %48 = vector.extract_strided_slice %20 {offsets = [0, 8], sizes = [8, 8], strides = [1, 1]} : vector<8x96xf32> to vector<8x8xf32>
    %49 = vector.extract_strided_slice %20 {offsets = [0, 40], sizes = [8, 8], strides = [1, 1]} : vector<8x96xf32> to vector<8x8xf32>
    %50 = vector.extract_strided_slice %20 {offsets = [0, 72], sizes = [8, 8], strides = [1, 1]} : vector<8x96xf32> to vector<8x8xf32>
    %51 = arith.truncf %48 : vector<8x8xf32> to vector<8x8xbf16>
    %52 = arith.truncf %49 : vector<8x8xf32> to vector<8x8xbf16>
    %cst_19 = arith.constant dense<0.000000e+00> : vector<8x8xf32>
    %53 = tpu.matmul %51, %52, %cst_19 {dimension_numbers = #tpu.dot_dimension_numbers<[1], [1], [0], [0], [0, 0, 1, 0], [], []>} : vector<8x8xbf16>, vector<8x8xbf16>, vector<8x8xf32> -> vector<8x8xf32>
    %cst_20 = arith.constant -1.000000e+30 : f32
    %54 = vector.broadcast %cst_20 : f32 to vector<8x8xf32>
    %55 = arith.select %4, %53, %54 : vector<8x8xi1>, vector<8x8xf32>
    %cst_21 = arith.constant dense<0xFF800000> : vector<8xf32>
    %56 = vector.multi_reduction <maximumf>, %55, %cst_21 [1] : vector<8x8xf32> to vector<8xf32>
    %57 = vector.shape_cast %56 : vector<8xf32> to vector<8x1xf32>
    %58 = vector.broadcast %57 : vector<8x1xf32> to vector<8x8xf32>
    %59 = arith.subf %55, %58 : vector<8x8xf32>
    %60 = math.exp %59 : vector<8x8xf32>
    %cst_22 = arith.constant dense<0.000000e+00> : vector<8xf32>
    %61 = vector.multi_reduction <add>, %60, %cst_22 [1] : vector<8x8xf32> to vector<8xf32>
    %62 = vector.shape_cast %61 : vector<8xf32> to vector<8x1xf32>
    %63 = tpu.reciprocal %62 {approx = true} : vector<8x1xf32> -> vector<8x1xf32>
    %64 = vector.broadcast %63 : vector<8x1xf32> to vector<8x8xf32>
    %65 = arith.mulf %60, %64 : vector<8x8xf32>
    %66 = arith.truncf %65 : vector<8x8xf32> to vector<8x8xbf16>
    %67 = arith.truncf %50 : vector<8x8xf32> to vector<8x8xbf16>
    %cst_23 = arith.constant dense<0.000000e+00> : vector<8x8xf32>
    %68 = tpu.matmul %66, %67, %cst_23 {dimension_numbers = #tpu.dot_dimension_numbers<[1], [0], [0], [1], [0, 0, 1, 1], [], []>} : vector<8x8xbf16>, vector<8x8xbf16>, vector<8x8xf32> -> vector<8x8xf32>
    %69 = arith.truncf %68 : vector<8x8xf32> to vector<8x8xbf16>
    %c1 = arith.constant 1 : index
    %c0_24 = arith.constant 0 : index
    %c0_25 = arith.constant 0 : index
    %70 = vector.load %arg4[%c1, %c0_24, %c0_25] : memref<4x8x32xbf16, #tpu.memory_space<vmem>>, vector<1x8x32xbf16>
    %71 = vector.shape_cast %70 : vector<1x8x32xbf16> to vector<8x32xbf16>
    %cst_26 = arith.constant dense<0.000000e+00> : vector<8x32xf32>
    %72 = tpu.matmul %69, %71, %cst_26 {dimension_numbers = #tpu.dot_dimension_numbers<[1], [0], [0], [1], [0, 0, 1, 1], [], []>} : vector<8x8xbf16>, vector<8x32xbf16>, vector<8x32xf32> -> vector<8x32xf32>
    %73 = arith.addf %47, %72 : vector<8x32xf32>
    %74 = vector.extract_strided_slice %20 {offsets = [0, 16], sizes = [8, 8], strides = [1, 1]} : vector<8x96xf32> to vector<8x8xf32>
    %75 = vector.extract_strided_slice %20 {offsets = [0, 48], sizes = [8, 8], strides = [1, 1]} : vector<8x96xf32> to vector<8x8xf32>
    %76 = vector.extract_strided_slice %20 {offsets = [0, 80], sizes = [8, 8], strides = [1, 1]} : vector<8x96xf32> to vector<8x8xf32>
    %77 = arith.truncf %74 : vector<8x8xf32> to vector<8x8xbf16>
    %78 = arith.truncf %75 : vector<8x8xf32> to vector<8x8xbf16>
    %cst_27 = arith.constant dense<0.000000e+00> : vector<8x8xf32>
    %79 = tpu.matmul %77, %78, %cst_27 {dimension_numbers = #tpu.dot_dimension_numbers<[1], [1], [0], [0], [0, 0, 1, 0], [], []>} : vector<8x8xbf16>, vector<8x8xbf16>, vector<8x8xf32> -> vector<8x8xf32>
    %cst_28 = arith.constant -1.000000e+30 : f32
    %80 = vector.broadcast %cst_28 : f32 to vector<8x8xf32>
    %81 = arith.select %4, %79, %80 : vector<8x8xi1>, vector<8x8xf32>
    %cst_29 = arith.constant dense<0xFF800000> : vector<8xf32>
    %82 = vector.multi_reduction <maximumf>, %81, %cst_29 [1] : vector<8x8xf32> to vector<8xf32>
    %83 = vector.shape_cast %82 : vector<8xf32> to vector<8x1xf32>
    %84 = vector.broadcast %83 : vector<8x1xf32> to vector<8x8xf32>
    %85 = arith.subf %81, %84 : vector<8x8xf32>
    %86 = math.exp %85 : vector<8x8xf32>
    %cst_30 = arith.constant dense<0.000000e+00> : vector<8xf32>
    %87 = vector.multi_reduction <add>, %86, %cst_30 [1] : vector<8x8xf32> to vector<8xf32>
    %88 = vector.shape_cast %87 : vector<8xf32> to vector<8x1xf32>
    %89 = tpu.reciprocal %88 {approx = true} : vector<8x1xf32> -> vector<8x1xf32>
    %90 = vector.broadcast %89 : vector<8x1xf32> to vector<8x8xf32>
    %91 = arith.mulf %86, %90 : vector<8x8xf32>
    %92 = arith.truncf %91 : vector<8x8xf32> to vector<8x8xbf16>
    %93 = arith.truncf %76 : vector<8x8xf32> to vector<8x8xbf16>
    %cst_31 = arith.constant dense<0.000000e+00> : vector<8x8xf32>
    %94 = tpu.matmul %92, %93, %cst_31 {dimension_numbers = #tpu.dot_dimension_numbers<[1], [0], [0], [1], [0, 0, 1, 1], [], []>} : vector<8x8xbf16>, vector<8x8xbf16>, vector<8x8xf32> -> vector<8x8xf32>
    %95 = arith.truncf %94 : vector<8x8xf32> to vector<8x8xbf16>
    %c2 = arith.constant 2 : index
    %c0_32 = arith.constant 0 : index
    %c0_33 = arith.constant 0 : index
    %96 = vector.load %arg4[%c2, %c0_32, %c0_33] : memref<4x8x32xbf16, #tpu.memory_space<vmem>>, vector<1x8x32xbf16>
    %97 = vector.shape_cast %96 : vector<1x8x32xbf16> to vector<8x32xbf16>
    %cst_34 = arith.constant dense<0.000000e+00> : vector<8x32xf32>
    %98 = tpu.matmul %95, %97, %cst_34 {dimension_numbers = #tpu.dot_dimension_numbers<[1], [0], [0], [1], [0, 0, 1, 1], [], []>} : vector<8x8xbf16>, vector<8x32xbf16>, vector<8x32xf32> -> vector<8x32xf32>
    %99 = arith.addf %73, %98 : vector<8x32xf32>
    %100 = vector.extract_strided_slice %20 {offsets = [0, 24], sizes = [8, 8], strides = [1, 1]} : vector<8x96xf32> to vector<8x8xf32>
    %101 = vector.extract_strided_slice %20 {offsets = [0, 56], sizes = [8, 8], strides = [1, 1]} : vector<8x96xf32> to vector<8x8xf32>
    %102 = vector.extract_strided_slice %20 {offsets = [0, 88], sizes = [8, 8], strides = [1, 1]} : vector<8x96xf32> to vector<8x8xf32>
    %103 = arith.truncf %100 : vector<8x8xf32> to vector<8x8xbf16>
    %104 = arith.truncf %101 : vector<8x8xf32> to vector<8x8xbf16>
    %cst_35 = arith.constant dense<0.000000e+00> : vector<8x8xf32>
    %105 = tpu.matmul %103, %104, %cst_35 {dimension_numbers = #tpu.dot_dimension_numbers<[1], [1], [0], [0], [0, 0, 1, 0], [], []>} : vector<8x8xbf16>, vector<8x8xbf16>, vector<8x8xf32> -> vector<8x8xf32>
    %cst_36 = arith.constant -1.000000e+30 : f32
    %106 = vector.broadcast %cst_36 : f32 to vector<8x8xf32>
    %107 = arith.select %4, %105, %106 : vector<8x8xi1>, vector<8x8xf32>
    %cst_37 = arith.constant dense<0xFF800000> : vector<8xf32>
    %108 = vector.multi_reduction <maximumf>, %107, %cst_37 [1] : vector<8x8xf32> to vector<8xf32>
    %109 = vector.shape_cast %108 : vector<8xf32> to vector<8x1xf32>
    %110 = vector.broadcast %109 : vector<8x1xf32> to vector<8x8xf32>
    %111 = arith.subf %107, %110 : vector<8x8xf32>
    %112 = math.exp %111 : vector<8x8xf32>
    %cst_38 = arith.constant dense<0.000000e+00> : vector<8xf32>
    %113 = vector.multi_reduction <add>, %112, %cst_38 [1] : vector<8x8xf32> to vector<8xf32>
    %114 = vector.shape_cast %113 : vector<8xf32> to vector<8x1xf32>
    %115 = tpu.reciprocal %114 {approx = true} : vector<8x1xf32> -> vector<8x1xf32>
    %116 = vector.broadcast %115 : vector<8x1xf32> to vector<8x8xf32>
    %117 = arith.mulf %112, %116 : vector<8x8xf32>
    %118 = arith.truncf %117 : vector<8x8xf32> to vector<8x8xbf16>
    %119 = arith.truncf %102 : vector<8x8xf32> to vector<8x8xbf16>
    %cst_39 = arith.constant dense<0.000000e+00> : vector<8x8xf32>
    %120 = tpu.matmul %118, %119, %cst_39 {dimension_numbers = #tpu.dot_dimension_numbers<[1], [0], [0], [1], [0, 0, 1, 1], [], []>} : vector<8x8xbf16>, vector<8x8xbf16>, vector<8x8xf32> -> vector<8x8xf32>
    %121 = arith.truncf %120 : vector<8x8xf32> to vector<8x8xbf16>
    %c3 = arith.constant 3 : index
    %c0_40 = arith.constant 0 : index
    %c0_41 = arith.constant 0 : index
    %122 = vector.load %arg4[%c3, %c0_40, %c0_41] : memref<4x8x32xbf16, #tpu.memory_space<vmem>>, vector<1x8x32xbf16>
    %123 = vector.shape_cast %122 : vector<1x8x32xbf16> to vector<8x32xbf16>
    %cst_42 = arith.constant dense<0.000000e+00> : vector<8x32xf32>
    %124 = tpu.matmul %121, %123, %cst_42 {dimension_numbers = #tpu.dot_dimension_numbers<[1], [0], [0], [1], [0, 0, 1, 1], [], []>} : vector<8x8xbf16>, vector<8x32xbf16>, vector<8x32xf32> -> vector<8x32xf32>
    %125 = arith.addf %99, %124 : vector<8x32xf32>
    %126 = arith.addf %1, %125 : vector<8x32xf32>
    %c0_43 = arith.constant 0 : index
    %c0_44 = arith.constant 0 : index
    %127 = vector.load %arg5[%c0_43, %c0_44] : memref<1x32xf32, #tpu.memory_space<vmem>>, vector<1x32xf32>
    %128 = arith.mulf %126, %126 : vector<8x32xf32>
    %cst_45 = arith.constant dense<0.000000e+00> : vector<8xf32>
    %129 = vector.multi_reduction <add>, %128, %cst_45 [1] : vector<8x32xf32> to vector<8xf32>
    %130 = vector.shape_cast %129 : vector<8xf32> to vector<8x1xf32>
    %cst_46 = arith.constant 3.200000e+01 : f32
    %131 = vector.broadcast %cst_46 : f32 to vector<8x1xf32>
    %132 = arith.divf %130, %131 : vector<8x1xf32>
    %cst_47 = arith.constant 9.99999974E-6 : f32
    %133 = vector.broadcast %cst_47 : f32 to vector<8x1xf32>
    %134 = arith.addf %132, %133 : vector<8x1xf32>
    %135 = math.rsqrt %134 : vector<8x1xf32>
    %136 = vector.broadcast %135 : vector<8x1xf32> to vector<8x32xf32>
    %137 = arith.mulf %126, %136 : vector<8x32xf32>
    %138 = vector.broadcast %127 : vector<1x32xf32> to vector<8x32xf32>
    %139 = arith.mulf %137, %138 : vector<8x32xf32>
    %140 = arith.truncf %139 : vector<8x32xf32> to vector<8x32xbf16>
    %c0_48 = arith.constant 0 : index
    %c0_49 = arith.constant 0 : index
    %141 = vector.load %arg6[%c0_48, %c0_49] : memref<32x256xbf16, #tpu.memory_space<vmem>>, vector<32x256xbf16>
    %cst_50 = arith.constant dense<0.000000e+00> : vector<8x256xf32>
    %142 = tpu.matmul %140, %141, %cst_50 {dimension_numbers = #tpu.dot_dimension_numbers<[1], [0], [0], [1], [0, 0, 1, 1], [], []>} : vector<8x32xbf16>, vector<32x256xbf16>, vector<8x256xf32> -> vector<8x256xf32>
    %143 = vector.extract_strided_slice %142 {offsets = [0, 0], sizes = [8, 128], strides = [1, 1]} : vector<8x256xf32> to vector<8x128xf32>
    %144 = vector.extract_strided_slice %142 {offsets = [0, 128], sizes = [8, 128], strides = [1, 1]} : vector<8x256xf32> to vector<8x128xf32>
    %145 = arith.negf %143 : vector<8x128xf32>
    %146 = math.exp %145 : vector<8x128xf32>
    %cst_51 = arith.constant 1.000000e+00 : f32
    %147 = vector.broadcast %cst_51 : f32 to vector<8x128xf32>
    %148 = arith.addf %147, %146 : vector<8x128xf32>
    %149 = arith.divf %147, %148 : vector<8x128xf32>
    %150 = arith.mulf %143, %149 : vector<8x128xf32>
    %151 = arith.mulf %150, %144 : vector<8x128xf32>
    %152 = arith.truncf %151 : vector<8x128xf32> to vector<8x128xbf16>
    %c0_52 = arith.constant 0 : index
    %c0_53 = arith.constant 0 : index
    %153 = vector.load %arg7[%c0_52, %c0_53] : memref<128x32xbf16, #tpu.memory_space<vmem>>, vector<128x32xbf16>
    %cst_54 = arith.constant dense<0.000000e+00> : vector<8x32xf32>
    %154 = tpu.matmul %152, %153, %cst_54 {dimension_numbers = #tpu.dot_dimension_numbers<[1], [0], [0], [1], [0, 0, 1, 1], [], []>} : vector<8x128xbf16>, vector<128x32xbf16>, vector<8x32xf32> -> vector<8x32xf32>
    %155 = arith.addf %126, %154 : vector<8x32xf32>
    %c0_55 = arith.constant 0 : index
    %c0_56 = arith.constant 0 : index
    %156 = vector.load %arg8[%c0_55, %c0_56] : memref<1x32xf32, #tpu.memory_space<vmem>>, vector<1x32xf32>
    %157 = arith.mulf %155, %155 : vector<8x32xf32>
    %cst_57 = arith.constant dense<0.000000e+00> : vector<8xf32>
    %158 = vector.multi_reduction <add>, %157, %cst_57 [1] : vector<8x32xf32> to vector<8xf32>
    %159 = vector.shape_cast %158 : vector<8xf32> to vector<8x1xf32>
    %cst_58 = arith.constant 3.200000e+01 : f32
    %160 = vector.broadcast %cst_58 : f32 to vector<8x1xf32>
    %161 = arith.divf %159, %160 : vector<8x1xf32>
    %cst_59 = arith.constant 9.99999974E-6 : f32
    %162 = vector.broadcast %cst_59 : f32 to vector<8x1xf32>
    %163 = arith.addf %161, %162 : vector<8x1xf32>
    %164 = math.rsqrt %163 : vector<8x1xf32>
    %165 = vector.broadcast %164 : vector<8x1xf32> to vector<8x32xf32>
    %166 = arith.mulf %155, %165 : vector<8x32xf32>
    %167 = vector.broadcast %156 : vector<1x32xf32> to vector<8x32xf32>
    %168 = arith.mulf %166, %167 : vector<8x32xf32>
    %169 = arith.truncf %168 : vector<8x32xf32> to vector<8x32xbf16>
    %c0_60 = arith.constant 0 : index
    %c0_61 = arith.constant 0 : index
    %170 = vector.load %arg9[%c0_60, %c0_61] : memref<32x128xbf16, #tpu.memory_space<vmem>>, vector<32x128xbf16>
    %cst_62 = arith.constant dense<0.000000e+00> : vector<8x128xf32>
    %171 = tpu.matmul %169, %170, %cst_62 {dimension_numbers = #tpu.dot_dimension_numbers<[1], [0], [0], [1], [0, 0, 1, 1], [], []>} : vector<8x32xbf16>, vector<32x128xbf16>, vector<8x128xf32> -> vector<8x128xf32>
    %c0_63 = arith.constant 0 : index
    %c0_64 = arith.constant 0 : index
    %c0_65 = arith.constant 0 : index
    %172 = vector.load %arg10[%c0_63, %c0_64, %c0_65] : memref<1x8x128xf32, #tpu.memory_space<vmem>>, vector<1x8x128xf32>
    %173 = vector.shape_cast %172 : vector<1x8x128xf32> to vector<8x128xf32>
    %174 = vector.shape_cast %171 : vector<8x128xf32> to vector<1x8x128xf32>
    tpu.vector_store %arg10[%c0_63, %c0_64, %c0_65], %174 {strides = array<i32>} : memref<1x8x128xf32, #tpu.memory_space<vmem>>, vector<1x8x128xf32>,
    return
  }
  func.func @transform_0(%arg0: i32) -> (i32, i32, i32) {
    %c0_i32 = arith.constant 0 : i32
    %c0_i32_0 = arith.constant 0 : i32
    %c0_i32_1 = arith.constant 0 : i32
    return %arg0, %c0_i32, %c0_i32_0 : i32, i32, i32
  }
  func.func @transform_1(%arg0: i32) -> (i32, i32) {
    %c0_i32 = arith.constant 0 : i32
    %c0_i32_0 = arith.constant 0 : i32
    %c0_i32_1 = arith.constant 0 : i32
    return %c0_i32, %c0_i32_0 : i32, i32
  }
  func.func @transform_2(%arg0: i32) -> (i32, i32) {
    %c0_i32 = arith.constant 0 : i32
    %c0_i32_0 = arith.constant 0 : i32
    %c0_i32_1 = arith.constant 0 : i32
    return %c0_i32, %c0_i32_0 : i32, i32
  }
  func.func @transform_3(%arg0: i32) -> (i32, i32, i32) {
    %c0_i32 = arith.constant 0 : i32
    %c0_i32_0 = arith.constant 0 : i32
    %c0_i32_1 = arith.constant 0 : i32
    %c0_i32_2 = arith.constant 0 : i32
    return %c0_i32, %c0_i32_0, %c0_i32_1 : i32, i32, i32
  }
  func.func @transform_4(%arg0: i32) -> (i32, i32) {
    %c0_i32 = arith.constant 0 : i32
    %c0_i32_0 = arith.constant 0 : i32
    %c0_i32_1 = arith.constant 0 : i32
    return %c0_i32, %c0_i32_0 : i32, i32
  }
  func.func @transform_5(%arg0: i32) -> (i32, i32) {
    %c0_i32 = arith.constant 0 : i32
    %c0_i32_0 = arith.constant 0 : i32
    %c0_i32_1 = arith.constant 0 : i32
    return %c0_i32, %c0_i32_0 : i32, i32
  }
  func.func @transform_6(%arg0: i32) -> (i32, i32) {
    %c0_i32 = arith.constant 0 : i32
    %c0_i32_0 = arith.constant 0 : i32
    %c0_i32_1 = arith.constant 0 : i32
    return %c0_i32, %c0_i32_0 : i32, i32
  }
  func.func @transform_7(%arg0: i32) -> (i32, i32) {
    %c0_i32 = arith.constant 0 : i32
    %c0_i32_0 = arith.constant 0 : i32
    %c0_i32_1 = arith.constant 0 : i32
    return %c0_i32, %c0_i32_0 : i32, i32
  }
  func.func @transform_8(%arg0: i32) -> (i32, i32) {
    %c0_i32 = arith.constant 0 : i32
    %c0_i32_0 = arith.constant 0 : i32
    %c0_i32_1 = arith.constant 0 : i32
    return %c0_i32, %c0_i32_0 : i32, i32
  }
  func.func @transform_9(%arg0: i32) -> (i32, i32, i32) {
    %c0_i32 = arith.constant 0 : i32
    %c0_i32_0 = arith.constant 0 : i32
    %c0_i32_1 = arith.constant 0 : i32
    return %arg0, %c0_i32, %c0_i32_0 : i32, i32, i32
  }
}

</mosaic_0001>

<llo_original>
// kernel: language_model_forward.1
$region0: #{language_model_forward.1}
  #allocation0 [shape = 'u32[]', space=smem, size = 0x4, offset = 0x4, fixed_abs, tag = 'smem constant byte address 0x4 - core index']
  #allocation1 [shape = 'u32[72,128]{1,0:T(1,128)}', space=vmem, size = 0x9000, scoped, tag = 'internal scratch']
  %s0 = inlined_call_operand.vmem [shape: f32[2,8,32], index: 0, kind: input, shape index: {}]
  %s1 = inlined_call_operand.vmem [shape: f32[1,32], index: 1, kind: input, shape index: {}]
  %s2 = inlined_call_operand.vmem [shape: bf16[32,96], index: 2, kind: input, shape index: {}]
  %s3 = inlined_call_operand.vmem [shape: bf16[4,8,32], index: 3, kind: input, shape index: {}]
  %s4 = inlined_call_operand.vmem [shape: f32[1,32], index: 4, kind: input, shape index: {}]
  %s5 = inlined_call_operand.vmem [shape: bf16[32,256], index: 5, kind: input, shape index: {}]
  %s6 = inlined_call_operand.vmem [shape: bf16[128,32], index: 6, kind: input, shape index: {}]
  %s7 = inlined_call_operand.vmem [shape: f32[1,32], index: 7, kind: input, shape index: {}]
  %s8 = inlined_call_operand.vmem [shape: bf16[32,128], index: 8, kind: input, shape index: {}]
  %s9 = inlined_call_operand.hbm [shape: f32[2,8,128], index: 9, kind: output, shape index: {}]
  %s10 = sld [smem:[#allocation0]]
  $region69: #{language_model_forward.1} parent=0
    _
  %s12 = ssub.s32 1, %s10
  %s13 = scalar_select 0, %s12, %s10
  $region1: #{language_model_forward.1} parent=0
    #allocation2 [shape = 'u8[8192]{0}', space=vmem, size = 0x2000, scoped, tag = 'output window, operand 0']
    #allocation3 [shape = 's32[2]{0}', space=sflag, size = 0x8, scoped, tag = 'scoped memory for language_model_forward.1']
    %14 = vsyncpa [#allocation3], 0
    %s15 = scalar_lea.sflag [#allocation3], 1
    %16 = vsyncpa %s15, 0
    loop: start=0, step=1, limit=4
    $region2: #{language_model_forward.1} parent=1 // loop_pre_header
      _
    $region3: #{language_model_forward.1} parent=1 // loop_header
      %s18 = sphi 0, %s22
      %p19 = scmp.ge.s32.totalorder %s18, 4
      %s28 = sphi 0, %s30
      %s31 = sphi 0, %s28
      %s32 = sphi 0, %s31
      %s48 = sphi 0, %s32
      %s52 = sphi 0, %s52
      %s54 = sphi 0, %s52
      %s55 = sphi 0, %s54
      %s69 = sphi 0, %s55
      %s73 = sphi 0, %s73
      %s75 = sphi 0, %s73
      %s76 = sphi 0, %s75
      %s90 = sphi 0, %s76
      %s94 = sphi 0, %s94
      %s96 = sphi 0, %s94
      %s97 = sphi 0, %s96
      %s111 = sphi 0, %s97
      %s115 = sphi 0, %s115
      %s117 = sphi 0, %s115
      %s118 = sphi 0, %s117
      %s132 = sphi 0, %s118
      %s136 = sphi 0, %s136
      %s138 = sphi 0, %s136
      %s139 = sphi 0, %s138
      %s153 = sphi 0, %s139
      %s157 = sphi 0, %s157
      %s159 = sphi 0, %s157
      %s160 = sphi 0, %s159
      %s174 = sphi 0, %s160
      %s178 = sphi 0, %s178
      %s180 = sphi 0, %s178
      %s181 = sphi 0, %s180
      %s195 = sphi 0, %s181
      %s199 = sphi 0, %s199
      %s201 = sphi 0, %s199
      %s202 = sphi 0, %s201
      %s216 = sphi 0, %s202
      %s222 = sphi 0, %s224
      %s225 = sphi 0, %s222
      %s226 = sphi 0, %s225
      %s242 = sphi 0, %s226
    $region4: #{language_model_forward.1} parent=1 // loop_header_branch
      %21 = sbr.rel (%p19) target = $region8
    $region5: #{language_model_forward.1} parent=1 // loop_body
      %s23 = ssub.s32 %s18, 1
      %s24 = ssub.s32 %s18, 2
      %s25 = sadd.s32 %s18, 1
      %s26 = ssub.s32 %s18, %s25
      %p27 = scmp.eq.s32.totalorder %s26, 0
      %s29 = sadd.s32 %s28, 1
      %s30 = scalar_select %p27, %s28, %s29
      %p33 = pneg %p27
      %p34 = scmp.eq.s32.totalorder %s18, 1
      %p35 = por %p33, %p34
      %p36 = scmp.ne.s32.totalorder %s28, %s31
      %p37 = scmp.eq.s32.totalorder %s18, 0
      %p38 = por %p36, %p37
      %p39 = scmp.ne.s32.totalorder %s28, %s31
      %p40 = scmp.eq.s32.totalorder %s23, 1
      %p41 = por %p39, %p40
      %p42 = scmp.ne.s32.totalorder %s31, %s32
      %p43 = scmp.eq.s32.totalorder %s23, 0
      %p44 = por %p42, %p43
      %p45 = scmp.ne.s32.totalorder %s31, %s32
      %p46 = scmp.eq.s32.totalorder %s24, 1
      %p47 = por %p45, %p46
      %p49 = scmp.ne.s32.totalorder %s32, %s48
      %p50 = scmp.eq.s32.totalorder %s24, 0
      %p51 = por %p49, %p50
      %s53 = sadd.s32 %s52, 1
      %p56 = scmp.eq.s32.totalorder %s18, 1
      %p57 = scmp.ne.s32.totalorder %s52, %s54
      %p58 = scmp.eq.s32.totalorder %s18, 0
      %p59 = por %p57, %p58
      %p60 = scmp.ne.s32.totalorder %s52, %s54
      %p61 = scmp.eq.s32.totalorder %s23, 1
      %p62 = por %p60, %p61
      %p63 = scmp.ne.s32.totalorder %s54, %s55
      %p64 = scmp.eq.s32.totalorder %s23, 0
      %p65 = por %p63, %p64
      %p66 = scmp.ne.s32.totalorder %s54, %s55
      %p67 = scmp.eq.s32.totalorder %s24, 1
      %p68 = por %p66, %p67
      %p70 = scmp.ne.s32.totalorder %s55, %s69
      %p71 = scmp.eq.s32.totalorder %s24, 0
      %p72 = por %p70, %p71
      %s74 = sadd.s32 %s73, 1
      %p77 = scmp.eq.s32.totalorder %s18, 1
      %p78 = scmp.ne.s32.totalorder %s73, %s75
      %p79 = scmp.eq.s32.totalorder %s18, 0
      %p80 = por %p78, %p79
      %p81 = scmp.ne.s32.totalorder %s73, %s75
      %p82 = scmp.eq.s32.totalorder %s23, 1
      %p83 = por %p81, %p82
      %p84 = scmp.ne.s32.totalorder %s75, %s76
      %p85 = scmp.eq.s32.totalorder %s23, 0
      %p86 = por %p84, %p85
      %p87 = scmp.ne.s32.totalorder %s75, %s76
      %p88 = scmp.eq.s32.totalorder %s24, 1
      %p89 = por %p87, %p88
      %p91 = scmp.ne.s32.totalorder %s76, %s90
      %p92 = scmp.eq.s32.totalorder %s24, 0
      %p93 = por %p91, %p92
      %s95 = sadd.s32 %s94, 1
      %p98 = scmp.eq.s32.totalorder %s18, 1
      %p99 = scmp.ne.s32.totalorder %s94, %s96
      %p100 = scmp.eq.s32.totalorder %s18, 0
      %p101 = por %p99, %p100
      %p102 = scmp.ne.s32.totalorder %s94, %s96
      %p103 = scmp.eq.s32.totalorder %s23, 1
      %p104 = por %p102, %p103
      %p105 = scmp.ne.s32.totalorder %s96, %s97
      %p106 = scmp.eq.s32.totalorder %s23, 0
      %p107 = por %p105, %p106
      %p108 = scmp.ne.s32.totalorder %s96, %s97
      %p109 = scmp.eq.s32.totalorder %s24, 1
      %p110 = por %p108, %p109
      %p112 = scmp.ne.s32.totalorder %s97, %s111
      %p113 = scmp.eq.s32.totalorder %s24, 0
      %p114 = por %p112, %p113
      %s116 = sadd.s32 %s115, 1
      %p119 = scmp.eq.s32.totalorder %s18, 1
      %p120 = scmp.ne.s32.totalorder %s115, %s117
      %p121 = scmp.eq.s32.totalorder %s18, 0
      %p122 = por %p120, %p121
      %p123 = scmp.ne.s32.totalorder %s115, %s117
      %p124 = scmp.eq.s32.totalorder %s23, 1
      %p125 = por %p123, %p124
      %p126 = scmp.ne.s32.totalorder %s117, %s118
      %p127 = scmp.eq.s32.totalorder %s23, 0
      %p128 = por %p126, %p127
      %p129 = scmp.ne.s32.totalorder %s117, %s118
      %p130 = scmp.eq.s32.totalorder %s24, 1
      %p131 = por %p129, %p130
      %p133 = scmp.ne.s32.totalorder %s118, %s132
      %p134 = scmp.eq.s32.totalorder %s24, 0
      %p135 = por %p133, %p134
      %s137 = sadd.s32 %s136, 1
      %p140 = scmp.eq.s32.totalorder %s18, 1
      %p141 = scmp.ne.s32.totalorder %s136, %s138
      %p142 = scmp.eq.s32.totalorder %s18, 0
      %p143 = por %p141, %p142
      %p144 = scmp.ne.s32.totalorder %s136, %s138
      %p145 = scmp.eq.s32.totalorder %s23, 1
      %p146 = por %p144, %p145
      %p147 = scmp.ne.s32.totalorder %s138, %s139
      %p148 = scmp.eq.s32.totalorder %s23, 0
      %p149 = por %p147, %p148
      %p150 = scmp.ne.s32.totalorder %s138, %s139
      %p151 = scmp.eq.s32.totalorder %s24, 1
      %p152 = por %p150, %p151
      %p154 = scmp.ne.s32.totalorder %s139, %s153
      %p155 = scmp.eq.s32.totalorder %s24, 0
      %p156 = por %p154, %p155
      %s158 = sadd.s32 %s157, 1
      %p161 = scmp.eq.s32.totalorder %s18, 1
      %p162 = scmp.ne.s32.totalorder %s157, %s159
      %p163 = scmp.eq.s32.totalorder %s18, 0
      %p164 = por %p162, %p163
      %p165 = scmp.ne.s32.totalorder %s157, %s159
      %p166 = scmp.eq.s32.totalorder %s23, 1
      %p167 = por %p165, %p166
      %p168 = scmp.ne.s32.totalorder %s159, %s160
      %p169 = scmp.eq.s32.totalorder %s23, 0
      %p170 = por %p168, %p169
      %p171 = scmp.ne.s32.totalorder %s159, %s160
      %p172 = scmp.eq.s32.totalorder %s24, 1
      %p173 = por %p171, %p172
      %p175 = scmp.ne.s32.totalorder %s160, %s174
      %p176 = scmp.eq.s32.totalorder %s24, 0
      %p177 = por %p175, %p176
      %s179 = sadd.s32 %s178, 1
      %p182 = scmp.eq.s32.totalorder %s18, 1
      %p183 = scmp.ne.s32.totalorder %s178, %s180
      %p184 = scmp.eq.s32.totalorder %s18, 0
      %p185 = por %p183, %p184
      %p186 = scmp.ne.s32.totalorder %s178, %s180
      %p187 = scmp.eq.s32.totalorder %s23, 1
      %p188 = por %p186, %p187
      %p189 = scmp.ne.s32.totalorder %s180, %s181
      %p190 = scmp.eq.s32.totalorder %s23, 0
      %p191 = por %p189, %p190
      %p192 = scmp.ne.s32.totalorder %s180, %s181
      %p193 = scmp.eq.s32.totalorder %s24, 1
      %p194 = por %p192, %p193
      %p196 = scmp.ne.s32.totalorder %s181, %s195
      %p197 = scmp.eq.s32.totalorder %s24, 0
      %p198 = por %p196, %p197
      %s200 = sadd.s32 %s199, 1
      %p203 = scmp.eq.s32.totalorder %s18, 1
      %p204 = scmp.ne.s32.totalorder %s199, %s201
      %p205 = scmp.eq.s32.totalorder %s18, 0
      %p206 = por %p204, %p205
      %p207 = scmp.ne.s32.totalorder %s199, %s201
      %p208 = scmp.eq.s32.totalorder %s23, 1
      %p209 = por %p207, %p208
      %p210 = scmp.ne.s32.totalorder %s201, %s202
      %p211 = scmp.eq.s32.totalorder %s23, 0
      %p212 = por %p210, %p211
      %p213 = scmp.ne.s32.totalorder %s201, %s202
      %p214 = scmp.eq.s32.totalorder %s24, 1
      %p215 = por %p213, %p214
      %p217 = scmp.ne.s32.totalorder %s202, %s216
      %p218 = scmp.eq.s32.totalorder %s24, 0
      %p219 = por %p217, %p218
      %s220 = ssub.s32 %s18, %s25
      %p221 = scmp.eq.s32.totalorder %s220, 0
      %s223 = sadd.s32 %s222, 1
      %s224 = scalar_select %p221, %s222, %s223
      %p227 = pneg %p221
      %p228 = scmp.eq.s32.totalorder %s18, 1
      %p229 = por %p227, %p228
      %p230 = scmp.ne.s32.totalorder %s222, %s225
      %p231 = scmp.eq.s32.totalorder %s18, 0
      %p232 = por %p230, %p231
      %p233 = scmp.ne.s32.totalorder %s222, %s225
      %p234 = scmp.eq.s32.totalorder %s23, 1
      %p235 = por %p233, %p234
      %p236 = scmp.ne.s32.totalorder %s225, %s226
      %p237 = scmp.eq.s32.totalorder %s23, 0
      %p238 = por %p236, %p237
      %p239 = scmp.ne.s32.totalorder %s225, %s226
      %p240 = scmp.eq.s32.totalorder %s24, 1
      %p241 = por %p239, %p240
      %p243 = scmp.ne.s32.totalorder %s226, %s242
      %p244 = scmp.eq.s32.totalorder %s24, 0
      %p245 = por %p243, %p244
      %p246 = scmp.le.s32.totalorder 1, %s18
      %p247 = scmp.lt.s32.totalorder %s18, 3
      %p248 = pnand %p246, %p247
      %p249 = pneg %p248
      // Predicated region
      $region9: #{language_model_forward.1} parent=5 // pred_check
        _
      $region10: #{language_model_forward.1} parent=5 // pred_check_branch
        %251 = sbr.rel (%p248) target = $region12
      $region11: #{language_model_forward.1} parent=5 // pred_region
        %s252 = ssub.s32 %s18, 1
        // Predicated region
        $region13: #{language_model_forward.1} parent=11 // pred_check
          %p253 = pneg %p65
        $region14: #{language_model_forward.1} parent=11 // pred_check_branch
          %255 = sbr.rel (%p253) target = $region16
        $region15: #{language_model_forward.1} parent=11 // pred_region
          _
        $region16: #{language_model_forward.1} parent=11 // pred_fallthru
          _
        // Predicated region
        $region17: #{language_model_forward.1} parent=11 // pred_check
          %p256 = pneg %p86
        $region18: #{language_model_forward.1} parent=11 // pred_check_branch
          %258 = sbr.rel (%p256) target = $region20
        $region19: #{language_model_forward.1} parent=11 // pred_region
          _
        $region20: #{language_model_forward.1} parent=11 // pred_fallthru
          _
        // Predicated region
        $region21: #{language_model_forward.1} parent=11 // pred_check
          %p259 = pneg %p107
        $region22: #{language_model_forward.1} parent=11 // pred_check_branch
          %261 = sbr.rel (%p259) target = $region24
        $region23: #{language_model_forward.1} parent=11 // pred_region
          _
        $region24: #{language_model_forward.1} parent=11 // pred_fallthru
          _
        // Predicated region
        $region25: #{language_model_forward.1} parent=11 // pred_check
          %p262 = pneg %p128
        $region26: #{language_model_forward.1} parent=11 // pred_check_branch
          %264 = sbr.rel (%p262) target = $region28
        $region27: #{language_model_forward.1} parent=11 // pred_region
          _
        $region28: #{language_model_forward.1} parent=11 // pred_fallthru
          _
        // Predicated region
        $region29: #{language_model_forward.1} parent=11 // pred_check
          %p265 = pneg %p149
        $region30: #{language_model_forward.1} parent=11 // pred_check_branch
          %267 = sbr.rel (%p265) target = $region32
        $region31: #{language_model_forward.1} parent=11 // pred_region
          _
        $region32: #{language_model_forward.1} parent=11 // pred_fallthru
          _
        // Predicated region
        $region33: #{language_model_forward.1} parent=11 // pred_check
          %p268 = pneg %p170
        $region34: #{language_model_forward.1} parent=11 // pred_check_branch
          %270 = sbr.rel (%p268) target = $region36
        $region35: #{language_model_forward.1} parent=11 // pred_region
          _
        $region36: #{language_model_forward.1} parent=11 // pred_fallthru
          _
        // Predicated region
        $region37: #{language_model_forward.1} parent=11 // pred_check
          %p271 = pneg %p191
        $region38: #{language_model_forward.1} parent=11 // pred_check_branch
          %273 = sbr.rel (%p271) target = $region40
        $region39: #{language_model_forward.1} parent=11 // pred_region
          _
        $region40: #{language_model_forward.1} parent=11 // pred_fallthru
          _
        // Predicated region
        $region41: #{language_model_forward.1} parent=11 // pred_check
          %p274 = pneg %p212
        $region42: #{language_model_forward.1} parent=11 // pred_check_branch
          %276 = sbr.rel (%p274) target = $region44
        $region43: #{language_model_forward.1} parent=11 // pred_region
          _
        $region44: #{language_model_forward.1} parent=11 // pred_fallthru
          _
      $region12: #{language_model_forward.1} parent=5 // pred_fallthru
        _
      %p277 = scmp.lt.s32.totalorder %s18, 2
      // Predicated region
      $region45: #{language_model_forward.1} parent=5 // pred_check
        %p278 = pneg %p277
      $region46: #{language_model_forward.1} parent=5 // pred_check_branch
        %280 = sbr.rel (%p278) target = $region48
      $region47: #{language_model_forward.1} parent=5 // pred_region
        // Predicated region
        $region49: #{language_model_forward.1} parent=47 // pred_check
          %p281 = pneg %p38
        $region50: #{language_model_forward.1} parent=47 // pred_check_branch
          %283 = sbr.rel (%p281) target = $region52
        $region51: #{language_model_forward.1} parent=47 // pred_region
          %p284 = scmp.lt.s32.totalorder %s18, 1
          %s285 = scalar_select %p284, %s18, 1
          %s286 = smul.addr %s285, 8
          %s287 = scalar_lea.vmem %s0, %s286
        $region52: #{language_model_forward.1} parent=47 // pred_fallthru
          _
      $region48: #{language_model_forward.1} parent=5 // pred_fallthru
        _
      %p288 = scmp.le.s32.totalorder 1, %s18
      %p289 = scmp.lt.s32.totalorder %s18, 3
      %p290 = pnand %p288, %p289
      %p291 = pneg %p290
      // Predicated region
      $region53: #{language_model_forward.1} parent=5 // pred_check
        _
      $region54: #{language_model_forward.1} parent=5 // pred_check_branch
        %293 = sbr.rel (%p290) target = $region56
      $region55: #{language_model_forward.1} parent=5 // pred_region
        %s294 = ssub.s32 %s18, 1
        %p295 = scmp.lt.s32.totalorder %s23, 1
        %s296 = scalar_select %p295, %s23, 1
        %s297 = smul.addr %s296, 8
        %s298 = scalar_lea.vmem %s0, %s297
        %p299 = pneg %p44
        %p300 = pneg %p41
        %p301 = pneg %p65
        %p302 = pneg %p62
        %p303 = pneg %p86
        %p304 = pneg %p83
        %p305 = pneg %p107
        %p306 = pneg %p104
        %p307 = pneg %p128
        %p308 = pneg %p125
        %p309 = pneg %p149
        %p310 = pneg %p146
        %p311 = pneg %p170
        %p312 = pneg %p167
        %p313 = pneg %p191
        %p314 = pneg %p188
        %p315 = pneg %p212
        %p316 = pneg %p209
        %p317 = pneg %p238
        %p318 = pneg %p235
        %s319 = sand.u32 %s225, 1
        %s320 = scalar_lea.sflag [#allocation3], %s319
        %s321 = sand.u32 %s225, 1
        %s322 = smul.addr %s321, 8
        %s323 = scalar_lea.vmem [#allocation2], %s322
        %p324 = scmp.lt.s32.totalorder %s23, 1
        %s325 = scalar_select %p324, %s23, 1
        %s326 = smul.addr %s325, 8
        %s327 = scalar_lea.vmem %s0, %s326
        %v329 = vld [vmem:[%s327] sm:$0xff]
        %v330 = vlaneseq
        %v331 = vshrl.u32 %v330, 7
        %v332 = vlaneseq
        %v333 = vand.u32 %v332, 127
        %vm334 = vcmp.ge.s32.totalorder %v331, %v333
        %v335 = vld [vmem:[%s1] sm:$0x1]
        %v336 = vmul.f32 %v329, %v329
        %vm337 = vcmask 261120
        %v338 = vsel %vm337, %v336, 0.0
        %339 = vadd.xlane.f32.xlu0 %v338
        %v340 = vpop.xlane.xlu0 %339
        %v341 = vrcp.pop 32.0
        %v342 = vmul.f32 32.0, %v341
        %v343 = vsub.f32 1.0, %v342
        %v344 = vmul.f32 %v341, %v343
        %v345 = vadd.f32 %v341, %v344
        %vm346 = vweird.f32 %v341
        %v347 = vsel %vm346, %v341, %v345
        %v348 = vmul.f32 %v340, %v347
        %v349 = vadd.f32 %v348, 1e-05
        %v350 = vrsqrt.pop %v349
        %v351 = vmul.f32 %v350, %v349
        %v352 = vmul.f32 %v351, %v350
        %v353 = vmul.f32 0.5, %v352
        %v354 = vsub.f32 1.5, %v353
        %v355 = vmul.f32 %v350, %v354
        %vm356 = vweird.f32 %v349
        %vm357 = vweird.f32 %v350
        %vm358 = vmor %vm356, %vm357
        %v359 = vsel %vm358, %v350, %v355
        %v360 = vmul.f32 %v329, %v359
        %v362 = vperm.slane %v335, 0
        %v364 = vmul.f32 %v360, %v362
        %v365 = vpack.c.bf16 %v364, %v364
        %v366 = vld [vmem:[%s2] sm:$0xf]
        %v367 = vld [vmem:[%s2 + $0x4] sm:$0xf]
        %v368 = vld [vmem:[%s2 + $0x8] sm:$0xf]
        %v369 = vld [vmem:[%s2 + $0xc] sm:$0xf]
        %v374 = vunpack.c.l.b16 %v366
        %v375 = vunpack.c.l.b16 %v367
        %v376 = vunpack.c.l.b16 %v368
        %v377 = vunpack.c.l.b16 %v369
        %v378 = vpack.c.b16 %v375, %v374
        %v379 = vpack.c.b16 %v377, %v376
        %v383 = vsel %vm337, %v365, 0
        %385 = vmatpush.bf16.msra.mxu0 0
        %386 = vmatpush.bf16.msra.mxu0 0
        %387 = vmatpush.bf16.msra.mxu0 0
        %388 = vmatpush.bf16.msra.mxu0 0
        %389 = vmatpush.bf16.msra.mxu0 0
        %390 = vmatpush.bf16.msra.mxu0 0
        %391 = vmatpush.bf16.msra.mxu0 %v379
        %392 = vmatpush.bf16.msra.mxu0 %v378
        %393 = vmatmul.bf16.gmra.mxu0 %v383
        %v394 = vpop.f32.mrf.mxu0
        %v395 = vadd.f32 0.0, %v394
        %v396 = vpop.f32.mrf.mxu0
        %397 = vdwg.mxu0
        %v398 = vpack.c.bf16 %v395, %v395
        %400 = vrot.lane.b32.xlu0 %v398, 96
        %v401 = vpop.permute.xlu0 %400
        %vm402 = vcmask 64512
        %v404 = vsel %vm402, %v398, 0
        %v407 = vsel %vm402, %v401, 0
        %409 = vmatpush.bf16.xpose.msra.mxu0 0
        %410 = vmatpush.bf16.xpose.msra.mxu0 0
        %411 = vmatpush.bf16.xpose.msra.mxu0 0
        %412 = vmatpush.bf16.xpose.msra.mxu0 0
        %413 = vmatpush.bf16.xpose.msra.mxu0 0
        %414 = vmatpush.bf16.xpose.msra.mxu0 0
        %415 = vmatpush.bf16.xpose.msra.mxu0 0
        %416 = vmatpush.bf16.xpose.msra.mxu0 %v407
        %417 = vmatmul.bf16.gmra.mxu0 %v404
        %v418 = vpop.f32.mrf.mxu0
        %v419 = vadd.f32 0.0, %v418
        %v420 = vpop.f32.mrf.mxu0
        %421 = vdwg.mxu0
        %v422 = vsel %vm334, %v419, -1e+30
        %v423 = vsel %vm402, %v422, -inf
        %424 = vmax.xlane.f32.xlu0 %v423
        %v425 = vpop.xlane.xlu0 %424
        %v426 = vsub.f32 %v422, %v425
        %v427 = vmul.f32 %v426, 1.442695
        %v428 = vpow.pop %v427
        %v429 = vsel %vm402, %v428, 0.0
        %430 = vadd.xlane.f32.xlu0 %v429
        %v431 = vpop.xlane.xlu0 %430
        %v432 = vrcp.pop %v431
        %v433 = vmul.f32 %v428, %v432
        %v434 = vpack.c.bf16 %v433, %v433
        %435 = vrot.lane.b32.xlu0 %v398, 64
        %v436 = vpop.permute.xlu0 %435
        %v438 = vsel %vm402, %v434, 0
        %vm440 = vcmask 1043456
        %v442 = vsel %vm440, %v436, 0
        %444 = vmatpush.bf16.msra.mxu0 0
        %445 = vmatpush.bf16.msra.mxu0 0
        %446 = vmatpush.bf16.msra.mxu0 0
        %447 = vmatpush.bf16.msra.mxu0 0
        %448 = vmatpush.bf16.msra.mxu0 0
        %449 = vmatpush.bf16.msra.mxu0 0
        %450 = vmatpush.bf16.msra.mxu0 0
        %451 = vmatpush.bf16.msra.mxu0 %v442
        %452 = vmatmul.bf16.gmra.mxu0 %v438
        %v453 = vpop.f32.mrf.mxu0
        %v454 = vadd.f32 0.0, %v453
        %v455 = vpop.f32.mrf.mxu0
        %456 = vdwg.mxu0
        %v457 = vpack.c.bf16 %v454, %v454
        %v458 = vld [vmem:[%s3] sm:$0xf]
        %459 = vrot.lane.b32.xlu0 %v398, 120
        %v460 = vpop.permute.xlu0 %459
        %461 = vrot.lane.b32.xlu0 %v398, 88
        %v462 = vpop.permute.xlu0 %461
        %v464 = vsel %vm402, %v460, 0
        %v467 = vsel %vm402, %v462, 0
        %469 = vmatpush.bf16.xpose.msra.mxu0 0
        %470 = vmatpush.bf16.xpose.msra.mxu0 0
        %471 = vmatpush.bf16.xpose.msra.mxu0 0
        %472 = vmatpush.bf16.xpose.msra.mxu0 0
        %473 = vmatpush.bf16.xpose.msra.mxu0 0
        %474 = vmatpush.bf16.xpose.msra.mxu0 0
        %475 = vmatpush.bf16.xpose.msra.mxu0 0
        %476 = vmatpush.bf16.xpose.msra.mxu0 %v467
        %477 = vmatmul.bf16.gmra.mxu0 %v464
        %v478 = vpop.f32.mrf.mxu0
        %v479 = vadd.f32 0.0, %v478
        %v480 = vpop.f32.mrf.mxu0
        %481 = vdwg.mxu0
        %v482 = vsel %vm334, %v479, -1e+30
        %v483 = vsel %vm402, %v482, -inf
        %484 = vmax.xlane.f32.xlu0 %v483
        %v485 = vpop.xlane.xlu0 %484
        %v486 = vsub.f32 %v482, %v485
        %v487 = vmul.f32 %v486, 1.442695
        %v488 = vpow.pop %v487
        %v489 = vsel %vm402, %v488, 0.0
        %490 = vadd.xlane.f32.xlu0 %v489
        %v491 = vpop.xlane.xlu0 %490
        %v492 = vrcp.pop %v491
        %v493 = vmul.f32 %v488, %v492
        %v494 = vpack.c.bf16 %v493, %v493
        %495 = vrot.lane.b32.xlu0 %v398, 56
        %v496 = vpop.permute.xlu0 %495
        %v498 = vsel %vm402, %v494, 0
        %v501 = vsel %vm440, %v496, 0
        %503 = vmatpush.bf16.msra.mxu0 0
        %504 = vmatpush.bf16.msra.mxu0 0
        %505 = vmatpush.bf16.msra.mxu0 0
        %506 = vmatpush.bf16.msra.mxu0 0
        %507 = vmatpush.bf16.msra.mxu0 0
        %508 = vmatpush.bf16.msra.mxu0 0
        %509 = vmatpush.bf16.msra.mxu0 0
        %510 = vmatpush.bf16.msra.mxu0 %v501
        %511 = vmatmul.bf16.gmra.mxu0 %v498
        %v512 = vpop.f32.mrf.mxu0
        %v513 = vadd.f32 0.0, %v512
        %v514 = vpop.f32.mrf.mxu0
        %515 = vdwg.mxu0
        %v516 = vpack.c.bf16 %v513, %v513
        %s517 = scalar_lea.vmem %s3, 4
        %v518 = vld [vmem:[%s517] sm:$0xf]
        %v520 = vsel %vm402, %v516, 0
        %v523 = vsel %vm440, %v518, 0
        %525 = vmatpush.bf16.msra.mxu0 0
        %526 = vmatpush.bf16.msra.mxu0 0
        %527 = vmatpush.bf16.msra.mxu0 0
        %528 = vmatpush.bf16.msra.mxu0 0
        %529 = vmatpush.bf16.msra.mxu0 0
        %530 = vmatpush.bf16.msra.mxu0 0
        %531 = vmatpush.bf16.msra.mxu0 0
        %532 = vmatpush.bf16.msra.mxu0 %v523
        %533 = vmatmul.bf16.gmra.mxu0 %v520
        %v534 = vpop.f32.mrf.mxu0
        %v535 = vadd.f32 0.0, %v534
        %v536 = vpop.f32.mrf.mxu0
        %537 = vdwg.mxu0
        %v539 = vsel %vm402, %v457, 0
        %v542 = vsel %vm440, %v458, 0
        %544 = vmatpush.bf16.msra.mxu0 0
        %545 = vmatpush.bf16.msra.mxu0 0
        %546 = vmatpush.bf16.msra.mxu0 0
        %547 = vmatpush.bf16.msra.mxu0 0
        %548 = vmatpush.bf16.msra.mxu0 0
        %549 = vmatpush.bf16.msra.mxu0 0
        %550 = vmatpush.bf16.msra.mxu0 0
        %551 = vmatpush.bf16.msra.mxu0 %v542
        %552 = vmatmul.bf16.gmra.mxu0 %v539
        %v553 = vpop.f32.mrf.mxu0
        %v554 = vadd.f32 %v535, %v553
        %v555 = vpop.f32.mrf.mxu0
        %556 = vdwg.mxu0
        %557 = vrot.lane.b32.xlu0 %v398, 112
        %v558 = vpop.permute.xlu0 %557
        %559 = vrot.lane.b32.xlu0 %v398, 80
        %v560 = vpop.permute.xlu0 %559
        %v562 = vsel %vm402, %v558, 0
        %v565 = vsel %vm402, %v560, 0
        %567 = vmatpush.bf16.xpose.msra.mxu0 0
        %568 = vmatpush.bf16.xpose.msra.mxu0 0
        %569 = vmatpush.bf16.xpose.msra.mxu0 0
        %570 = vmatpush.bf16.xpose.msra.mxu0 0
        %571 = vmatpush.bf16.xpose.msra.mxu0 0
        %572 = vmatpush.bf16.xpose.msra.mxu0 0
        %573 = vmatpush.bf16.xpose.msra.mxu0 0
        %574 = vmatpush.bf16.xpose.msra.mxu0 %v565
        %575 = vmatmul.bf16.gmra.mxu0 %v562
        %v576 = vpop.f32.mrf.mxu0
        %v577 = vadd.f32 0.0, %v576
        %v578 = vpop.f32.mrf.mxu0
        %579 = vdwg.mxu0
        %v580 = vsel %vm334, %v577, -1e+30
        %v581 = vsel %vm402, %v580, -inf
        %582 = vmax.xlane.f32.xlu0 %v581
        %v583 = vpop.xlane.xlu0 %582
        %v584 = vsub.f32 %v580, %v583
        %v585 = vmul.f32 %v584, 1.442695
        %v586 = vpow.pop %v585
        %v587 = vsel %vm402, %v586, 0.0
        %588 = vadd.xlane.f32.xlu0 %v587
        %v589 = vpop.xlane.xlu0 %588
        %v590 = vrcp.pop %v589
        %v591 = vmul.f32 %v586, %v590
        %v592 = vpack.c.bf16 %v591, %v591
        %593 = vrot.lane.b32.xlu0 %v398, 48
        %v594 = vpop.permute.xlu0 %593
        %v596 = vsel %vm402, %v592, 0
        %v599 = vsel %vm440, %v594, 0
        %601 = vmatpush.bf16.msra.mxu0 0
        %602 = vmatpush.bf16.msra.mxu0 0
        %603 = vmatpush.bf16.msra.mxu0 0
        %604 = vmatpush.bf16.msra.mxu0 0
        %605 = vmatpush.bf16.msra.mxu0 0
        %606 = vmatpush.bf16.msra.mxu0 0
        %607 = vmatpush.bf16.msra.mxu0 0
        %608 = vmatpush.bf16.msra.mxu0 %v599
        %609 = vmatmul.bf16.gmra.mxu0 %v596
        %v610 = vpop.f32.mrf.mxu0
        %v611 = vadd.f32 0.0, %v610
        %v612 = vpop.f32.mrf.mxu0
        %613 = vdwg.mxu0
        %v614 = vpack.c.bf16 %v611, %v611
        %s615 = scalar_lea.vmem %s3, 8
        %v616 = vld [vmem:[%s615] sm:$0xf]
        %v618 = vsel %vm402, %v614, 0
        %v621 = vsel %vm440, %v616, 0
        %623 = vmatpush.bf16.msra.mxu0 0
        %624 = vmatpush.bf16.msra.mxu0 0
        %625 = vmatpush.bf16.msra.mxu0 0
        %626 = vmatpush.bf16.msra.mxu0 0
        %627 = vmatpush.bf16.msra.mxu0 0
        %628 = vmatpush.bf16.msra.mxu0 0
        %629 = vmatpush.bf16.msra.mxu0 0
        %630 = vmatpush.bf16.msra.mxu0 %v621
        %631 = vmatmul.bf16.gmra.mxu0 %v618
        %v632 = vpop.f32.mrf.mxu0
        %v633 = vadd.f32 0.0, %v632
        %v634 = vpop.f32.mrf.mxu0
        %635 = vdwg.mxu0
        %v636 = vadd.f32 %v554, %v633
        %637 = vrot.lane.b32.xlu0 %v398, 104
        %v638 = vpop.permute.xlu0 %637
        %639 = vrot.lane.b32.xlu0 %v398, 72
        %v640 = vpop.permute.xlu0 %639
        %v642 = vsel %vm402, %v638, 0
        %v645 = vsel %vm402, %v640, 0
        %647 = vmatpush.bf16.xpose.msra.mxu0 0
        %648 = vmatpush.bf16.xpose.msra.mxu0 0
        %649 = vmatpush.bf16.xpose.msra.mxu0 0
        %650 = vmatpush.bf16.xpose.msra.mxu0 0
        %651 = vmatpush.bf16.xpose.msra.mxu0 0
        %652 = vmatpush.bf16.xpose.msra.mxu0 0
        %653 = vmatpush.bf16.xpose.msra.mxu0 0
        %654 = vmatpush.bf16.xpose.msra.mxu0 %v645
        %655 = vmatmul.bf16.gmra.mxu0 %v642
        %v656 = vpop.f32.mrf.mxu0
        %v657 = vadd.f32 0.0, %v656
        %v658 = vpop.f32.mrf.mxu0
        %659 = vdwg.mxu0
        %v660 = vsel %vm334, %v657, -1e+30
        %v661 = vsel %vm402, %v660, -inf
        %662 = vmax.xlane.f32.xlu0 %v661
        %v663 = vpop.xlane.xlu0 %662
        %v664 = vsub.f32 %v660, %v663
        %v665 = vmul.f32 %v664, 1.442695
        %v666 = vpow.pop %v665
        %v667 = vsel %vm402, %v666, 0.0
        %668 = vadd.xlane.f32.xlu0 %v667
        %v669 = vpop.xlane.xlu0 %668
        %v670 = vrcp.pop %v669
        %v671 = vmul.f32 %v666, %v670
        %v672 = vpack.c.bf16 %v671, %v671
        %673 = vrot.lane.b32.xlu0 %v398, 40
        %v674 = vpop.permute.xlu0 %673
        %v676 = vsel %vm402, %v672, 0
        %v679 = vsel %vm440, %v674, 0
        %681 = vmatpush.bf16.msra.mxu0 0
        %682 = vmatpush.bf16.msra.mxu0 0
        %683 = vmatpush.bf16.msra.mxu0 0
        %684 = vmatpush.bf16.msra.mxu0 0
        %685 = vmatpush.bf16.msra.mxu0 0
        %686 = vmatpush.bf16.msra.mxu0 0
        %687 = vmatpush.bf16.msra.mxu0 0
        %688 = vmatpush.bf16.msra.mxu0 %v679
        %689 = vmatmul.bf16.gmra.mxu0 %v676
        %v690 = vpop.f32.mrf.mxu0
        %v691 = vadd.f32 0.0, %v690
        %v692 = vpop.f32.mrf.mxu0
        %693 = vdwg.mxu0
        %v694 = vpack.c.bf16 %v691, %v691
        %s695 = scalar_lea.vmem %s3, 12
        %v696 = vld [vmem:[%s695] sm:$0xf]
        %v698 = vsel %vm402, %v694, 0
        %v701 = vsel %vm440, %v696, 0
        %703 = vmatpush.bf16.msra.mxu0 0
        %704 = vmatpush.bf16.msra.mxu0 0
        %705 = vmatpush.bf16.msra.mxu0 0
        %706 = vmatpush.bf16.msra.mxu0 0
        %707 = vmatpush.bf16.msra.mxu0 0
        %708 = vmatpush.bf16.msra.mxu0 0
        %709 = vmatpush.bf16.msra.mxu0 0
        %710 = vmatpush.bf16.msra.mxu0 %v701
        %711 = vmatmul.bf16.gmra.mxu0 %v698
        %v712 = vpop.f32.mrf.mxu0
        %v713 = vadd.f32 0.0, %v712
        %v714 = vpop.f32.mrf.mxu0
        %715 = vdwg.mxu0
        %v716 = vadd.f32 %v636, %v713
        %v717 = vadd.f32 %v329, %v716
        %v718 = vld [vmem:[%s4] sm:$0x1]
        %v719 = vmul.f32 %v717, %v717
        %v720 = vsel %vm337, %v719, 0.0
        %721 = vadd.xlane.f32.xlu0 %v720
        %v722 = vpop.xlane.xlu0 %721
        %v723 = vmul.f32 %v722, %v347
        %v724 = vadd.f32 %v723, 1e-05
        %v725 = vrsqrt.pop %v724
        %v726 = vmul.f32 %v725, %v724
        %v727 = vmul.f32 %v726, %v725
        %v728 = vmul.f32 0.5, %v727
        %v729 = vsub.f32 1.5, %v728
        %v730 = vmul.f32 %v725, %v729
        %vm731 = vweird.f32 %v724
        %vm732 = vweird.f32 %v725
        %vm733 = vmor %vm731, %vm732
        %v734 = vsel %vm733, %v725, %v730
        %v735 = vmul.f32 %v717, %v734
        %v737 = vperm.slane %v718, 0
        %v739 = vmul.f32 %v735, %v737
        %v740 = vpack.c.bf16 %v739, %v739
        %v741 = vld [vmem:[%s5] sm:$0xff]
        %v742 = vld [vmem:[%s5 + $0x8] sm:$0xff]
        %v743 = vld [vmem:[%s5 + $0x10] sm:$0xff]
        %v744 = vld [vmem:[%s5 + $0x18] sm:$0xff]
        %v749 = vunpack.c.l.b16 %v741
        %v750 = vunpack.c.h.b16 %v741
        %v751 = vunpack.c.l.b16 %v742
        %v752 = vunpack.c.h.b16 %v742
        %v753 = vunpack.c.l.b16 %v743
        %v754 = vunpack.c.h.b16 %v743
        %v755 = vunpack.c.l.b16 %v744
        %v756 = vunpack.c.h.b16 %v744
        %v757 = vpack.c.b16 %v751, %v749
        %v758 = vpack.c.b16 %v752, %v750
        %v759 = vpack.c.b16 %v755, %v753
        %v760 = vpack.c.b16 %v756, %v754
        %v766 = vsel %vm337, %v740, 0
        %768 = vmatpush.bf16.msra.mxu0 0
        %769 = vmatpush.bf16.msra.mxu0 0
        %770 = vmatpush.bf16.msra.mxu0 0
        %771 = vmatpush.bf16.msra.mxu0 0
        %772 = vmatpush.bf16.msra.mxu0 0
        %773 = vmatpush.bf16.msra.mxu0 0
        %774 = vmatpush.bf16.msra.mxu0 %v759
        %775 = vmatpush.bf16.msra.mxu0 %v757
        %776 = vmatmul.bf16.gmra.mxu0 %v766
        %v777 = vpop.f32.mrf.mxu0
        %v778 = vadd.f32 0.0, %v777
        %v779 = vpop.f32.mrf.mxu0
        %780 = vdwg.mxu0
        %781 = vmatpush.bf16.msra.mxu0 0
        %782 = vmatpush.bf16.msra.mxu0 0
        %783 = vmatpush.bf16.msra.mxu0 0
        %784 = vmatpush.bf16.msra.mxu0 0
        %785 = vmatpush.bf16.msra.mxu0 0
        %786 = vmatpush.bf16.msra.mxu0 0
        %787 = vmatpush.bf16.msra.mxu0 %v760
        %788 = vmatpush.bf16.msra.mxu0 %v758
        %789 = vmatmul.bf16.gmra.mxu0 %v766
        %v790 = vpop.f32.mrf.mxu0
        %v791 = vadd.f32 0.0, %v790
        %v792 = vpop.f32.mrf.mxu0
        %793 = vdwg.mxu0
        %v794 = vxor.u32 %v778, 2147483648
        %v795 = vmul.f32 %v794, 1.442695
        %v796 = vpow.pop %v795
        %v797 = vadd.f32 %v796, 1.0
        %v798 = vrcp.pop %v797
        %v799 = vmul.f32 %v797, %v798
        %v800 = vsub.f32 1.0, %v799
        %v801 = vmul.f32 %v798, %v800
        %v802 = vadd.f32 %v798, %v801
        %vm803 = vweird.f32 %v797
        %vm804 = vweird.f32 %v798
        %vm805 = vmor %vm803, %vm804
        %v806 = vsel %vm805, %v798, %v802
        %v807 = vand.u32 2147483647, %v797
        %vm808 = vcmp.eq.f32.partialorder %v807, 8.507059e+37
        %v809 = vand.u32 %v797, 2147483648
        %v810 = vor.u32 1.1754944e-38, %v809
        %v811 = vsel %vm808, %v810, %v806
        %v812 = vmul.f32 1.0, %v811
        %v813 = vmul.f32 %v778, %v812
        %v814 = vmul.f32 %v813, %v791
        %v815 = vpack.c.bf16 %v814, %v814
        %v816 = vld [vmem:[%s6] sm:$0xf]
        %v817 = vld [vmem:[%s6 + $0x4] sm:$0xf]
        %v818 = vld [vmem:[%s6 + $0x8] sm:$0xf]
        %v819 = vld [vmem:[%s6 + $0xc] sm:$0xf]
        %v820 = vld [vmem:[%s6 + $0x10] sm:$0xf]
        %v821 = vld [vmem:[%s6 + $0x14] sm:$0xf]
        %v822 = vld [vmem:[%s6 + $0x18] sm:$0xf]
        %v823 = vld [vmem:[%s6 + $0x1c] sm:$0xf]
        %v824 = vld [vmem:[%s6 + $0x20] sm:$0xf]
        %v825 = vld [vmem:[%s6 + $0x24] sm:$0xf]
        %v826 = vld [vmem:[%s6 + $0x28] sm:$0xf]
        %v827 = vld [vmem:[%s6 + $0x2c] sm:$0xf]
        %v828 = vld [vmem:[%s6 + $0x30] sm:$0xf]
        %v829 = vld [vmem:[%s6 + $0x34] sm:$0xf]
        %v830 = vld [vmem:[%s6 + $0x38] sm:$0xf]
        %v831 = vld [vmem:[%s6 + $0x3c] sm:$0xf]
        %v848 = vunpack.c.l.b16 %v816
        %v849 = vunpack.c.l.b16 %v817
        %v850 = vunpack.c.l.b16 %v818
        %v851 = vunpack.c.l.b16 %v819
        %v852 = vunpack.c.l.b16 %v820
        %v853 = vunpack.c.l.b16 %v821
        %v854 = vunpack.c.l.b16 %v822
        %v855 = vunpack.c.l.b16 %v823
        %v856 = vunpack.c.l.b16 %v824
        %v857 = vunpack.c.l.b16 %v825
        %v858 = vunpack.c.l.b16 %v826
        %v859 = vunpack.c.l.b16 %v827
        %v860 = vunpack.c.l.b16 %v828
        %v861 = vunpack.c.l.b16 %v829
        %v862 = vunpack.c.l.b16 %v830
        %v863 = vunpack.c.l.b16 %v831
        %v864 = vpack.c.b16 %v849, %v848
        %v865 = vpack.c.b16 %v851, %v850
        %v866 = vpack.c.b16 %v853, %v852
        %v867 = vpack.c.b16 %v855, %v854
        %v868 = vpack.c.b16 %v857, %v856
        %v869 = vpack.c.b16 %v859, %v858
        %v870 = vpack.c.b16 %v861, %v860
        %v871 = vpack.c.b16 %v863, %v862
        %880 = vmatpush.bf16.msra.mxu0 %v871
        %881 = vmatpush.bf16.msra.mxu0 %v870
        %882 = vmatpush.bf16.msra.mxu0 %v869
        %883 = vmatpush.bf16.msra.mxu0 %v868
        %884 = vmatpush.bf16.msra.mxu0 %v867
        %885 = vmatpush.bf16.msra.mxu0 %v866
        %886 = vmatpush.bf16.msra.mxu0 %v865
        %887 = vmatpush.bf16.msra.mxu0 %v864
        %888 = vmatmul.bf16.gmra.mxu0 %v815
        %v889 = vpop.f32.mrf.mxu0
        %v890 = vadd.f32 0.0, %v889
        %v891 = vpop.f32.mrf.mxu0
        %892 = vdwg.mxu0
        %v893 = vadd.f32 %v717, %v890
        %v894 = vld [vmem:[%s7] sm:$0x1]
        %v895 = vmul.f32 %v893, %v893
        %v896 = vsel %vm337, %v895, 0.0
        %897 = vadd.xlane.f32.xlu0 %v896
        %v898 = vpop.xlane.xlu0 %897
        %v899 = vmul.f32 %v898, %v347
        %v900 = vadd.f32 %v899, 1e-05
        %v901 = vrsqrt.pop %v900
        %v902 = vmul.f32 %v901, %v900
        %v903 = vmul.f32 %v902, %v901
        %v904 = vmul.f32 0.5, %v903
        %v905 = vsub.f32 1.5, %v904
        %v906 = vmul.f32 %v901, %v905
        %vm907 = vweird.f32 %v900
        %vm908 = vweird.f32 %v901
        %vm909 = vmor %vm907, %vm908
        %v910 = vsel %vm909, %v901, %v906
        %v911 = vmul.f32 %v893, %v910
        %v913 = vperm.slane %v894, 0
        %v915 = vmul.f32 %v911, %v913
        %v916 = vpack.c.bf16 %v915, %v915
        %v917 = vld [vmem:[%s8] sm:$0xf]
        %v918 = vld [vmem:[%s8 + $0x4] sm:$0xf]
        %v919 = vld [vmem:[%s8 + $0x8] sm:$0xf]
        %v920 = vld [vmem:[%s8 + $0xc] sm:$0xf]
        %v925 = vunpack.c.l.b16 %v917
        %v926 = vunpack.c.l.b16 %v918
        %v927 = vunpack.c.l.b16 %v919
        %v928 = vunpack.c.l.b16 %v920
        %v929 = vpack.c.b16 %v926, %v925
        %v930 = vpack.c.b16 %v928, %v927
        %v934 = vsel %vm337, %v916, 0
        %936 = vmatpush.bf16.msra.mxu0 0
        %937 = vmatpush.bf16.msra.mxu0 0
        %938 = vmatpush.bf16.msra.mxu0 0
        %939 = vmatpush.bf16.msra.mxu0 0
        %940 = vmatpush.bf16.msra.mxu0 0
        %941 = vmatpush.bf16.msra.mxu0 0
        %942 = vmatpush.bf16.msra.mxu0 %v930
        %943 = vmatpush.bf16.msra.mxu0 %v929
        %944 = vmatmul.bf16.gmra.mxu0 %v934
        %v945 = vpop.f32.mrf.mxu0
        %v946 = vadd.f32 0.0, %v945
        %v947 = vpop.f32.mrf.mxu0
        %948 = vdwg.mxu0
        %949 = vst [vmem:[%s323] sm:$0xff] %v946
        %s950 = sand.u32 %s225, 1
        %s951 = scalar_lea.sflag [#allocation3], %s950
        %s952 = sand.u32 %s225, 1
        %s953 = smul.addr %s952, 8
        %s954 = scalar_lea.vmem [#allocation2], %s953
        // Predicated region
        $region57: #{language_model_forward.1} parent=55 // pred_check
          %p955 = pneg %p235
        $region58: #{language_model_forward.1} parent=55 // pred_check_branch
          %957 = sbr.rel (%p955) target = $region60
        $region59: #{language_model_forward.1} parent=55 // pred_region
          %959 = vsyncadd %s951, 0
          %s960 = smul.addr %s23, 8
          %s961 = scalar_lea.hbm %s9, %s960
          %s963 = sshll.u32 %s954, 4
          %s964 = int_to_ptr.vmem [resolvable:$true] %s963
          %s965 = sshll.u32 %s961, 4
          %s966 = int_to_ptr.hbm [resolvable:$true] %s965
          %968 = dma.vmem_to_hbm [thread:$0]  %s964, 128, %s966, %s951
        $region60: #{language_model_forward.1} parent=55 // pred_fallthru
          _
      $region56: #{language_model_forward.1} parent=5 // pred_fallthru
        _
      %p969 = scmp.le.s32.totalorder 2, %s18
      // Predicated region
      $region61: #{language_model_forward.1} parent=5 // pred_check
        %p970 = pneg %p969
      $region62: #{language_model_forward.1} parent=5 // pred_check_branch
        %972 = sbr.rel (%p970) target = $region64
      $region63: #{language_model_forward.1} parent=5 // pred_region
        %s973 = ssub.s32 %s18, 2
        // Predicated region
        $region65: #{language_model_forward.1} parent=63 // pred_check
          %p974 = pneg %p241
        $region66: #{language_model_forward.1} parent=63 // pred_check_branch
          %976 = sbr.rel (%p974) target = $region68
        $region67: #{language_model_forward.1} parent=63 // pred_region
          %s977 = sand.u32 %s226, 1
          %s978 = scalar_lea.sflag [#allocation3], %s977
          %s979 = sand.u32 %s226, 1
          %s980 = smul.addr %s979, 8
          %s981 = scalar_lea.vmem [#allocation2], %s980
          %983 = dma.done %s978, 128
        $region68: #{language_model_forward.1} parent=63 // pred_fallthru
          _
      $region64: #{language_model_forward.1} parent=5 // pred_fallthru
        _
    $region6: #{language_model_forward.1} parent=1 // loop_footer
      %s22 = sadd.s32 1, %s18
    $region7: #{language_model_forward.1} parent=1 // loop_footer_branch
      %17 = sbr.rel target = $region3
    $region8: #{language_model_forward.1} parent=1 // loop_exit
      _
    %984 = vsyncpa [#allocation3], 1
    %s985 = scalar_lea.sflag [#allocation3], 1
    %986 = vsyncpa %s985, 1

</llo_original>
